<compile_context>
chip_gen: v7x
topology: tpu7x:2x2x1
jax: 0.10.0
libtpu: 0.0.40
codegen_flags: <defaults>
</compile_context>

<pallas_src>
import jax
import jax.numpy as jnp
from jax.experimental import pallas as pl
from jax.experimental.pallas import tpu as pltpu


def _conv_stats_kernel(x_ref, w_ref, y_ref, sum_ref, sq_ref):
    # x_ref: (NB, Cin, TL) f32   -- cast to bf16 in-kernel (saves an HBM pass)
    # w_ref: (Cout, Cin)  bf16   -- resident across the grid
    # y_ref: (NB, Cout, TL) bf16 intermediate
    # sum_ref / sq_ref: (1, 1, Cout, 1) f32 per-step BN partials
    w = w_ref[...]
    cout = w.shape[0]
    s_acc = jnp.zeros((cout, 1), jnp.float32)
    q_acc = jnp.zeros((cout, 1), jnp.float32)
    for p in range(x_ref.shape[0]):            # static unroll over the NB batch planes
        xb = x_ref[p].astype(jnp.bfloat16)     # VPU cast feeding the MXU
        y = jnp.dot(w, xb, preferred_element_type=jnp.float32)   # (Cout, TL) f32
        y_ref[p] = y.astype(y_ref.dtype)
        s_acc = s_acc + jnp.sum(y, axis=1, keepdims=True)
        q_acc = q_acc + jnp.sum(y * y, axis=1, keepdims=True)
    sum_ref[...] = s_acc[None, None]
    sq_ref[...] = q_acc[None, None]


def _affine_kernel(y_ref, scale_ref, shift_ref, o_ref):
    # y_ref: (NB, Cout, TL) bf16 ; scale/shift: (Cout, 1) f32 broadcast along lanes
    o_ref[...] = y_ref[...].astype(jnp.float32) * scale_ref[...] + shift_ref[...]


def _vmem_budgets():
    """(block working-set budget, scoped VMEM limit).  Conservative for v7x
    (64 MiB VMEM per TC, 32 MiB default scoped); roomier on the 128-MiB
    generations (v5e / v6e) so blocks get closer to the HBM roofline."""
    budget, limit = 16 << 20, 32 << 20
    try:
        kind = jax.devices()[0].device_kind.lower()
        if ("v5" in kind) or ("v6" in kind):
            budget, limit = 40 << 20, 96 << 20
    except Exception:
        pass
    return budget, limit


def _choose_blocks(n, l, cin, cout, budget_bytes):
    """Pick (NB batch planes per step, TL lane tile).  TL is a multiple of 256
    when possible (256-wide MXU / lane-dense stores), then NB (a divisor of n,
    capped at 8 for unroll sanity) grows while the double-buffered per-step
    streams stay within the VMEM budget."""
    unit = 256 if l % 256 == 0 else 128
    # bytes per lane-column, double-buffered; max over kernel-1 / kernel-2 streams
    per_col = 2 * max(4 * cin + 2 * cout, 2 * cout + 4 * cout)
    tl = min(l, 4096, max(unit, (budget_bytes // per_col) // unit * unit))
    while l % tl:
        tl -= unit
    nb = 1
    for d in range(1, min(n, 8) + 1):
        if n % d == 0 and d * tl * per_col <= budget_bytes:
            nb = d
    return nb, tl


def concat_mechanism_forward(x_nchw, w, b, gamma, beta, eps=1e-5):
    """x_nchw: (N, 2*feature, H, W) f32; w: (Cout, Cin) from Conv2d weight (Cout,Cin,1,1);
    b, gamma, beta: (Cout,).  Train-mode BatchNorm (batch stats, biased variance).
    The conv bias `b` cancels exactly under train-mode BN (the batch mean absorbs it),
    so it is accepted for API parity but intentionally never used."""
    del b  # mathematically cancelled by the batch-norm mean subtraction

    n, cin, h, wd = x_nchw.shape
    cout = w.shape[0]
    l = h * wd
    m = n * l                            # true per-channel element count (BN denominator)

    x3 = x_nchw.reshape(n, cin, l)       # free reshape; stays f32 (cast happens in-kernel)
    # Pad the spatial (lane) axis to a multiple of 128.  Padded columns give y = W@0 = 0
    # exactly (no conv bias), so the BN sums are unaffected; we slice them off at the end.
    l_pad = ((l + 127) // 128) * 128
    if l_pad != l:
        x3 = jnp.pad(x3, ((0, 0), (0, 0), (0, l_pad - l)))

    budget, vmem_limit = _vmem_budgets()
    nb, tl = _choose_blocks(n, l_pad, cin, cout, budget)
    grid_n = n // nb
    grid_l = l_pad // tl

    wb = w.astype(jnp.bfloat16)          # tiny one-off cast

    cparams = pltpu.CompilerParams(
        dimension_semantics=("parallel", "parallel"),  # megacore-friendly, no serialization
        vmem_limit_bytes=vmem_limit,
    )

    # ---- Kernel 1: 1x1 conv (bf16 MXU matmul, f32 acc) + per-step BN partials ------------
    cost1 = pl.CostEstimate(
        flops=2 * n * l_pad * cin * cout,
        transcendentals=0,
        bytes_accessed=(n * cin * l_pad * 4 + cout * cin * 2
                        + n * cout * l_pad * 2 + 2 * grid_n * grid_l * cout * 4),
    )
    y3, sums, sqs = pl.pallas_call(
        _conv_stats_kernel,
        out_shape=(
            jax.ShapeDtypeStruct((n, cout, l_pad), jnp.bfloat16),
            jax.ShapeDtypeStruct((grid_n, grid_l, cout, 1), jnp.float32),
            jax.ShapeDtypeStruct((grid_n, grid_l, cout, 1), jnp.float32),
        ),
        grid_spec=pltpu.PrefetchScalarGridSpec(
            num_scalar_prefetch=0,
            grid=(grid_n, grid_l),
            in_specs=[
                pl.BlockSpec((nb, cin, tl), lambda i, j: (i, 0, j)),
                pl.BlockSpec((cout, cin), lambda i, j: (0, 0)),
            ],
            out_specs=[
                pl.BlockSpec((nb, cout, tl), lambda i, j: (i, 0, j)),
                pl.BlockSpec((1, 1, cout, 1), lambda i, j: (i, j, 0, 0)),
                pl.BlockSpec((1, 1, cout, 1), lambda i, j: (i, j, 0, 0)),
            ],
        ),
        compiler_params=cparams,
        cost_estimate=cost1,
    )(x3, wb)

    # ---- Glue: finish the tiny (grid_n*grid_l, Cout) reduction, fold BN into scale/shift --
    total_sum = jnp.sum(sums, axis=(0, 1, 3))              # (Cout,)
    total_sq = jnp.sum(sqs, axis=(0, 1, 3))                # (Cout,)
    mean = total_sum / m
    var = jnp.maximum(total_sq / m - mean * mean, 0.0)     # biased (train-mode) variance
    inv_std = jax.lax.rsqrt(var + eps)
    scale = (gamma * inv_std).reshape(cout, 1).astype(jnp.float32)
    shift = (beta - mean * gamma * inv_std).reshape(cout, 1).astype(jnp.float32)

    # ---- Kernel 2: per-channel affine (BN normalize + gamma/beta), lane-dense stores ------
    cost2 = pl.CostEstimate(
        flops=2 * n * cout * l_pad,
        transcendentals=0,
        bytes_accessed=n * cout * l_pad * 2 + n * cout * l_pad * 4 + 2 * cout * 4,
    )
    out3 = pl.pallas_call(
        _affine_kernel,
        out_shape=jax.ShapeDtypeStruct((n, cout, l_pad), jnp.float32),
        grid_spec=pltpu.PrefetchScalarGridSpec(
            num_scalar_prefetch=0,
            grid=(grid_n, grid_l),
            in_specs=[
                pl.BlockSpec((nb, cout, tl), lambda i, j: (i, 0, j)),
                pl.BlockSpec((cout, 1), lambda i, j: (0, 0)),
                pl.BlockSpec((cout, 1), lambda i, j: (0, 0)),
            ],
            out_specs=pl.BlockSpec((nb, cout, tl), lambda i, j: (i, 0, j)),
        ),
        compiler_params=cparams,
        cost_estimate=cost2,
    )(y3, scale, shift)

    if l_pad != l:
        out3 = out3[:, :, :l]
    # (N, Cout, L) -> (N, Cout, H, W): free reshape, no transpose.
    return out3.reshape(n, cout, h, wd)


if __name__ == "__main__":
    feature = 4
    N, H, W = 2, 16, 16
    cin, cout = 2 * feature, feature

    key = jax.random.PRNGKey(0)
    kx, kw, kb = jax.random.split(key, 3)

    # Conv2d 1x1 weight (Cout, Cin, 1, 1) -> (Cout, Cin); BatchNorm2d defaults gamma=1, beta=0.
    x = jax.random.normal(kx, (N, cin, H, W), dtype=jnp.float32)
    w = jax.random.normal(kw, (cout, cin), dtype=jnp.float32) * 0.1
    b = jax.random.normal(kb, (cout,), dtype=jnp.float32) * 0.1
    gamma = jnp.ones((cout,), jnp.float32)
    beta = jnp.zeros((cout,), jnp.float32)

    out = concat_mechanism_forward(x, w, b, gamma, beta)
    out = jax.block_until_ready(out)

    # Pure-JAX f32 reference (1x1 conv WITH bias + train-mode batch norm); the conv bias
    # cancels in the normalized output, which the kernel exploits by dropping it.
    xf = x.reshape(N, cin, -1)
    y_ref = jnp.einsum("oc,ncl->nol", w, xf) + b[None, :, None]
    mean = y_ref.mean(axis=(0, 2), keepdims=True)
    var = ((y_ref - mean) ** 2).mean(axis=(0, 2), keepdims=True)
    ref = (y_ref - mean) * jax.lax.rsqrt(var + 1e-5)
    ref = (ref * gamma[None, :, None] + beta[None, :, None]).reshape(N, cout, H, W)

    assert out.shape == (N, cout, H, W)
    # bf16 matmul operands + bf16 intermediate => compare at bf16-level tolerance.
    assert jnp.allclose(out, ref, atol=5e-2, rtol=5e-2), "mismatch vs reference"
    print("KERNEL_OK")
</pallas_src>

<mosaic_0001>
module attributes {stable_mosaic.version = 11 : i64} {
  func.func @_conv_stats_kernel(%arg0: i32, %arg1: i32, %arg2: memref<2x8x256xf32, #tpu.memory_space<vmem>>, %arg3: memref<4x8xbf16, #tpu.memory_space<vmem>>, %arg4: memref<2x4x256xbf16, #tpu.memory_space<vmem>>, %arg5: memref<1x1x4x1xf32, #tpu.memory_space<vmem>>, %arg6: memref<1x1x4x1xf32, #tpu.memory_space<vmem>>) attributes {dimension_semantics = [#tpu.dimension_semantics<parallel>, #tpu.dimension_semantics<parallel>], iteration_bounds = array<i64: 1, 1>, scalar_prefetch = 0 : i64, scratch_operands = 0 : i64, tpu.core_type = #tpu.core_type<tc>, window_params = [{transform_indices = @transform_0, window_bounds = array<i64: 2, 8, 256>}, {pipeline_mode = #tpu.pipeline_mode<synchronous>, transform_indices = @transform_1, window_bounds = array<i64: 4, 8>}, {transform_indices = @transform_2, window_bounds = array<i64: 2, 4, 256>}, {transform_indices = @transform_3, window_bounds = array<i64: 1, 1, 4, 1>}, {transform_indices = @transform_4, window_bounds = array<i64: 1, 1, 4, 1>}]} {
    %c0 = arith.constant 0 : index
    %c0_0 = arith.constant 0 : index
    %0 = vector.load %arg3[%c0, %c0_0] : memref<4x8xbf16, #tpu.memory_space<vmem>>, vector<4x8xbf16>
    %cst = arith.constant 0.000000e+00 : f32
    %1 = vector.broadcast %cst : f32 to vector<4x1xf32>
    %cst_1 = arith.constant 0.000000e+00 : f32
    %2 = vector.broadcast %cst_1 : f32 to vector<4x1xf32>
    %c0_2 = arith.constant 0 : index
    %c0_3 = arith.constant 0 : index
    %c0_4 = arith.constant 0 : index
    %3 = vector.load %arg2[%c0_2, %c0_3, %c0_4] : memref<2x8x256xf32, #tpu.memory_space<vmem>>, vector<1x8x256xf32>
    %4 = vector.shape_cast %3 : vector<1x8x256xf32> to vector<8x256xf32>
    %5 = arith.truncf %4 : vector<8x256xf32> to vector<8x256xbf16>
    %cst_5 = arith.constant dense<0.000000e+00> : vector<4x256xf32>
    %6 = tpu.matmul %0, %5, %cst_5 {dimension_numbers = #tpu.dot_dimension_numbers<[1], [0], [0], [1], [0, 0, 1, 1], [], []>} : vector<4x8xbf16>, vector<8x256xbf16>, vector<4x256xf32> -> vector<4x256xf32>
    %7 = arith.truncf %6 : vector<4x256xf32> to vector<4x256xbf16>
    %c0_6 = arith.constant 0 : index
    %c0_7 = arith.constant 0 : index
    %c0_8 = arith.constant 0 : index
    %8 = vector.load %arg4[%c0_6, %c0_7, %c0_8] : memref<2x4x256xbf16, #tpu.memory_space<vmem>>, vector<1x4x256xbf16>
    %9 = vector.shape_cast %8 : vector<1x4x256xbf16> to vector<4x256xbf16>
    %10 = vector.shape_cast %7 : vector<4x256xbf16> to vector<1x4x256xbf16>
    tpu.vector_store %arg4[%c0_6, %c0_7, %c0_8], %10 {strides = array<i32>} : memref<2x4x256xbf16, #tpu.memory_space<vmem>>, vector<1x4x256xbf16>,
    %cst_9 = arith.constant dense<0.000000e+00> : vector<4xf32>
    %11 = vector.multi_reduction <add>, %6, %cst_9 [1] : vector<4x256xf32> to vector<4xf32>
    %12 = vector.shape_cast %11 : vector<4xf32> to vector<4x1xf32>
    %13 = arith.addf %1, %12 : vector<4x1xf32>
    %14 = arith.mulf %6, %6 : vector<4x256xf32>
    %cst_10 = arith.constant dense<0.000000e+00> : vector<4xf32>
    %15 = vector.multi_reduction <add>, %14, %cst_10 [1] : vector<4x256xf32> to vector<4xf32>
    %16 = vector.shape_cast %15 : vector<4xf32> to vector<4x1xf32>
    %17 = arith.addf %2, %16 : vector<4x1xf32>
    %c1 = arith.constant 1 : index
    %c0_11 = arith.constant 0 : index
    %c0_12 = arith.constant 0 : index
    %18 = vector.load %arg2[%c1, %c0_11, %c0_12] : memref<2x8x256xf32, #tpu.memory_space<vmem>>, vector<1x8x256xf32>
    %19 = vector.shape_cast %18 : vector<1x8x256xf32> to vector<8x256xf32>
    %20 = arith.truncf %19 : vector<8x256xf32> to vector<8x256xbf16>
    %cst_13 = arith.constant dense<0.000000e+00> : vector<4x256xf32>
    %21 = tpu.matmul %0, %20, %cst_13 {dimension_numbers = #tpu.dot_dimension_numbers<[1], [0], [0], [1], [0, 0, 1, 1], [], []>} : vector<4x8xbf16>, vector<8x256xbf16>, vector<4x256xf32> -> vector<4x256xf32>
    %22 = arith.truncf %21 : vector<4x256xf32> to vector<4x256xbf16>
    %c1_14 = arith.constant 1 : index
    %c0_15 = arith.constant 0 : index
    %c0_16 = arith.constant 0 : index
    %23 = vector.load %arg4[%c1_14, %c0_15, %c0_16] : memref<2x4x256xbf16, #tpu.memory_space<vmem>>, vector<1x4x256xbf16>
    %24 = vector.shape_cast %23 : vector<1x4x256xbf16> to vector<4x256xbf16>
    %25 = vector.shape_cast %22 : vector<4x256xbf16> to vector<1x4x256xbf16>
    tpu.vector_store %arg4[%c1_14, %c0_15, %c0_16], %25 {strides = array<i32>} : memref<2x4x256xbf16, #tpu.memory_space<vmem>>, vector<1x4x256xbf16>,
    %cst_17 = arith.constant dense<0.000000e+00> : vector<4xf32>
    %26 = vector.multi_reduction <add>, %21, %cst_17 [1] : vector<4x256xf32> to vector<4xf32>
    %27 = vector.shape_cast %26 : vector<4xf32> to vector<4x1xf32>
    %28 = arith.addf %13, %27 : vector<4x1xf32>
    %29 = arith.mulf %21, %21 : vector<4x256xf32>
    %cst_18 = arith.constant dense<0.000000e+00> : vector<4xf32>
    %30 = vector.multi_reduction <add>, %29, %cst_18 [1] : vector<4x256xf32> to vector<4xf32>
    %31 = vector.shape_cast %30 : vector<4xf32> to vector<4x1xf32>
    %32 = arith.addf %17, %31 : vector<4x1xf32>
    %33 = vector.shape_cast %28 : vector<4x1xf32> to vector<1x1x4x1xf32>
    %c0_19 = arith.constant 0 : index
    %c0_20 = arith.constant 0 : index
    %c0_21 = arith.constant 0 : index
    %c0_22 = arith.constant 0 : index
    %34 = vector.load %arg5[%c0_19, %c0_20, %c0_21, %c0_22] : memref<1x1x4x1xf32, #tpu.memory_space<vmem>>, vector<1x1x4x1xf32>
    tpu.vector_store %arg5[%c0_19, %c0_20, %c0_21, %c0_22], %33 {strides = array<i32>} : memref<1x1x4x1xf32, #tpu.memory_space<vmem>>, vector<1x1x4x1xf32>,
    %35 = vector.shape_cast %32 : vector<4x1xf32> to vector<1x1x4x1xf32>
    %c0_23 = arith.constant 0 : index
    %c0_24 = arith.constant 0 : index
    %c0_25 = arith.constant 0 : index
    %c0_26 = arith.constant 0 : index
    %36 = vector.load %arg6[%c0_23, %c0_24, %c0_25, %c0_26] : memref<1x1x4x1xf32, #tpu.memory_space<vmem>>, vector<1x1x4x1xf32>
    tpu.vector_store %arg6[%c0_23, %c0_24, %c0_25, %c0_26], %35 {strides = array<i32>} : memref<1x1x4x1xf32, #tpu.memory_space<vmem>>, vector<1x1x4x1xf32>,
    return
  }
  func.func @transform_0(%arg0: i32, %arg1: i32) -> (i32, i32, i32) {
    %c0_i32 = arith.constant 0 : i32
    %c0_i32_0 = arith.constant 0 : i32
    return %arg0, %c0_i32, %arg1 : i32, i32, i32
  }
  func.func @transform_1(%arg0: i32, %arg1: i32) -> (i32, i32) {
    %c0_i32 = arith.constant 0 : i32
    %c0_i32_0 = arith.constant 0 : i32
    %c0_i32_1 = arith.constant 0 : i32
    return %c0_i32, %c0_i32_0 : i32, i32
  }
  func.func @transform_2(%arg0: i32, %arg1: i32) -> (i32, i32, i32) {
    %c0_i32 = arith.constant 0 : i32
    %c0_i32_0 = arith.constant 0 : i32
    return %arg0, %c0_i32, %arg1 : i32, i32, i32
  }
  func.func @transform_3(%arg0: i32, %arg1: i32) -> (i32, i32, i32, i32) {
    %c0_i32 = arith.constant 0 : i32
    %c0_i32_0 = arith.constant 0 : i32
    %c0_i32_1 = arith.constant 0 : i32
    return %arg0, %arg1, %c0_i32, %c0_i32_0 : i32, i32, i32, i32
  }
  func.func @transform_4(%arg0: i32, %arg1: i32) -> (i32, i32, i32, i32) {
    %c0_i32 = arith.constant 0 : i32
    %c0_i32_0 = arith.constant 0 : i32
    %c0_i32_1 = arith.constant 0 : i32
    return %arg0, %arg1, %c0_i32, %c0_i32_0 : i32, i32, i32, i32
  }
}

</mosaic_0001>

<llo_original>
// kernel: tpu_custom_call.1
$region0: #{tpu_custom_call.1}
  #allocation0 [shape = 'u32[]', space=smem, size = 0x4, offset = 0x4, fixed_abs, tag = 'smem constant byte address 0x4 - core index']
  #allocation1 [shape = 'u32[144,128]{1,0:T(1,128)}', space=vmem, size = 0x12000, scoped, tag = 'internal scratch']
  %s0 = inlined_call_operand.hbm [shape: f32[2,8,256], index: 0, kind: input, shape index: {}]
  %s1 = inlined_call_operand.vmem [shape: bf16[4,8], index: 1, kind: input, shape index: {}]
  %s2 = inlined_call_operand.hbm [shape: bf16[2,4,256], index: 2, kind: output, shape index: {0}]
  %s3 = inlined_call_operand.vmem [shape: f32[1,1,4,1], index: 3, kind: output, shape index: {1}]
  %s4 = inlined_call_operand.vmem [shape: f32[1,1,4,1], index: 4, kind: output, shape index: {2}]
  %5 = xla_tuple %s2, %s3, %s4
  %s6 = sld [smem:[#allocation0]]
  $region38: #{tpu_custom_call.1} parent=0
    _
  %s8 = ssub.s32 1, %s6
  %s9 = scalar_select 0, %s8, %s6
  $region1: #{tpu_custom_call.1} parent=0
    #allocation2 [shape = 'u8[16384]{0}', space=vmem, size = 0x4000, scoped, tag = 'input window, operand 0, single buffered']
    #allocation3 [shape = 's32[1]{0}', space=sflag, size = 0x4, scoped, tag = 'scoped memory for tpu_custom_call.1']
    #allocation4 [shape = 's32[1]{0}', space=sflag, size = 0x4, scoped, tag = 'scoped memory for tpu_custom_call.1']
    #allocation5 [shape = 'u8[4096]{0}', space=vmem, size = 0x1000, scoped, tag = 'output window, operand 0, single buffered']
    %10 = vsyncpa [#allocation3], 0
    %11 = vsyncpa [#allocation4], 0
    // Predicated region
    $region2: #{tpu_custom_call.1} parent=1 // pred_check
      _
    $region3: #{tpu_custom_call.1} parent=1 // pred_check_branch
      %13 = sbr.rel (0) target = $region5
    $region4: #{tpu_custom_call.1} parent=1 // pred_region
      %s15 = ssub.s32 512, 512
      %16 = vsyncadd [#allocation3], %s15
      %s17 = sshll.u32 [#allocation2], 4
      %s18 = int_to_ptr.vmem [resolvable:$true] %s17
      %23 = dma.hbm_to_vmem [thread:$0]  %s0, 512, %s18, [#allocation3], 256, 256, 16
    $region5: #{tpu_custom_call.1} parent=1 // pred_fallthru
      _
    // Predicated region
    $region6: #{tpu_custom_call.1} parent=1 // pred_check
      _
    $region7: #{tpu_custom_call.1} parent=1 // pred_check_branch
      %25 = sbr.rel (0) target = $region9
    $region8: #{tpu_custom_call.1} parent=1 // pred_region
      _
    $region9: #{tpu_custom_call.1} parent=1 // pred_fallthru
      _
    // Predicated region
    $region10: #{tpu_custom_call.1} parent=1 // pred_check
      _
    $region11: #{tpu_custom_call.1} parent=1 // pred_check_branch
      %27 = sbr.rel (0) target = $region13
    $region12: #{tpu_custom_call.1} parent=1 // pred_region
      %28 = dma.done [#allocation3], 512
    $region13: #{tpu_custom_call.1} parent=1 // pred_fallthru
      _
    %v30 = vld [vmem:[%s1] sm:$0x3]
    %v31 = vld [vmem:[#allocation2] sm:$0xff]
    %v32 = vld [vmem:[#allocation2 + $0x8] sm:$0xff]
    %v33 = vpack.c.bf16 %v31, %v31
    %v34 = vpack.c.bf16 %v32, %v32
    %vm35 = vcmask 64512
    %v37 = vsel %vm35, %v30, 0
    %vm39 = vcmask 1043456
    %v41 = vsel %vm39, %v33, 0
    %v44 = vsel %vm39, %v34, 0
    %46 = vmatprep.subr.bf16.mxu0 %v44
    %47 = vmatpush1.bf16.msra.mxu0 %v41
    %48 = vmatprep.subr.bf16.mxu0 0
    %49 = vmatpush1.bf16.msra.mxu0 0
    %50 = vmatprep.subr.bf16.mxu0 0
    %51 = vmatpush1.bf16.msra.mxu0 0
    %52 = vmatprep.subr.bf16.mxu0 0
    %53 = vmatpush1.bf16.msra.mxu0 0
    %54 = vmatprep.subr.bf16.mxu0 0
    %55 = vmatpush1.bf16.msra.mxu0 0
    %56 = vmatprep.subr.bf16.mxu0 0
    %57 = vmatpush1.bf16.msra.mxu0 0
    %58 = vmatprep.subr.bf16.mxu0 0
    %59 = vmatpush1.bf16.msra.mxu0 0
    %60 = vmatprep.subr.bf16.mxu0 0
    %61 = vmatpush1.bf16.msra.mxu0 0
    %62 = vmatprep.subr.bf16.mxu0 0
    %63 = vmatpush1.bf16.msra.mxu0 0
    %64 = vmatprep.subr.bf16.mxu0 0
    %65 = vmatpush1.bf16.msra.mxu0 0
    %66 = vmatprep.subr.bf16.mxu0 0
    %67 = vmatpush1.bf16.msra.mxu0 0
    %68 = vmatprep.subr.bf16.mxu0 0
    %69 = vmatpush1.bf16.msra.mxu0 0
    %70 = vmatprep.subr.bf16.mxu0 0
    %71 = vmatpush1.bf16.msra.mxu0 0
    %72 = vmatprep.subr.bf16.mxu0 0
    %73 = vmatpush1.bf16.msra.mxu0 0
    %74 = vmatprep.subr.bf16.mxu0 0
    %75 = vmatpush1.bf16.msra.mxu0 0
    %76 = vmatprep.subr.bf16.mxu0 0
    %77 = vmatpush1.bf16.msra.mxu0 0
    %78 = vmatprep.mubr.bf16.mxu0 0
    %79 = vmatmul.mubr.bf16.gmra.mrb[0].mxu0 %v37
    %v80 = vpop.f32.mrb[0].mxu0
    %v81 = vadd.f32 0.0, %v80
    %v82 = vpop.f32.mrb[0].mxu0
    %v83 = vadd.f32 0.0, %v82
    %v84 = vpop.f32.mrb[0].mxu0
    %v85 = vpop.f32.mrb[0].mxu0
    %86 = vdwg.mxu0
    %v87 = vpack.c.bf16 %v81, %v81
    %v88 = vpack.c.bf16 %v83, %v83
    %v91 = vcombine.low %v87, %v88
    %v93 = vunpack.c.l.s4 1983009808
    %v94 = vunpack.c.0.s8 %v93
    %v95 = vlaneseq
    %v96 = vshrl.u32 %v95, 7
    %v97 = vsub.s32 %v94, %v96
    %v98 = vrot.slane %v91, %v97
    %100 = vst [vmem:[#allocation5] sm:$0xf] %v98
    %v101 = vsel %vm39, %v81, 0.0
    %v102 = vsel %vm39, %v83, 0.0
    %v103 = vadd.f32 %v101, %v102
    %104 = vadd.xlane.f32.xlu0 %v103
    %v105 = vpop.xlane.xlu0 %104
    %v106 = vadd.f32 %v105, 0.0
    %v107 = vmul.f32 %v81, %v81
    %v108 = vmul.f32 %v83, %v83
    %v109 = vsel %vm39, %v107, 0.0
    %v110 = vsel %vm39, %v108, 0.0
    %v111 = vadd.f32 %v109, %v110
    %112 = vadd.xlane.f32.xlu0 %v111
    %v113 = vpop.xlane.xlu0 %112
    %v114 = vadd.f32 %v113, 0.0
    %s115 = scalar_lea.vmem [#allocation2], 16
    %v116 = vld [vmem:[%s115] sm:$0xff]
    %v117 = vld [vmem:[%s115 + $0x8] sm:$0xff]
    %v118 = vpack.c.bf16 %v116, %v116
    %v119 = vpack.c.bf16 %v117, %v117
    %v121 = vsel %vm39, %v118, 0
    %v124 = vsel %vm39, %v119, 0
    %126 = vmatprep.subr.bf16.mxu0 %v124
    %127 = vmatpush1.bf16.msra.mxu0 %v121
    %128 = vmatprep.subr.bf16.mxu0 0
    %129 = vmatpush1.bf16.msra.mxu0 0
    %130 = vmatprep.subr.bf16.mxu0 0
    %131 = vmatpush1.bf16.msra.mxu0 0
    %132 = vmatprep.subr.bf16.mxu0 0
    %133 = vmatpush1.bf16.msra.mxu0 0
    %134 = vmatprep.subr.bf16.mxu0 0
    %135 = vmatpush1.bf16.msra.mxu0 0
    %136 = vmatprep.subr.bf16.mxu0 0
    %137 = vmatpush1.bf16.msra.mxu0 0
    %138 = vmatprep.subr.bf16.mxu0 0
    %139 = vmatpush1.bf16.msra.mxu0 0
    %140 = vmatprep.subr.bf16.mxu0 0
    %141 = vmatpush1.bf16.msra.mxu0 0
    %142 = vmatprep.subr.bf16.mxu0 0
    %143 = vmatpush1.bf16.msra.mxu0 0
    %144 = vmatprep.subr.bf16.mxu0 0
    %145 = vmatpush1.bf16.msra.mxu0 0
    %146 = vmatprep.subr.bf16.mxu0 0
    %147 = vmatpush1.bf16.msra.mxu0 0
    %148 = vmatprep.subr.bf16.mxu0 0
    %149 = vmatpush1.bf16.msra.mxu0 0
    %150 = vmatprep.subr.bf16.mxu0 0
    %151 = vmatpush1.bf16.msra.mxu0 0
    %152 = vmatprep.subr.bf16.mxu0 0
    %153 = vmatpush1.bf16.msra.mxu0 0
    %154 = vmatprep.subr.bf16.mxu0 0
    %155 = vmatpush1.bf16.msra.mxu0 0
    %156 = vmatprep.subr.bf16.mxu0 0
    %157 = vmatpush1.bf16.msra.mxu0 0
    %158 = vmatprep.mubr.bf16.mxu0 0
    %159 = vmatmul.mubr.bf16.gmra.mrb[0].mxu0 %v37
    %v160 = vpop.f32.mrb[0].mxu0
    %v161 = vadd.f32 0.0, %v160
    %v162 = vpop.f32.mrb[0].mxu0
    %v163 = vadd.f32 0.0, %v162
    %v164 = vpop.f32.mrb[0].mxu0
    %v165 = vpop.f32.mrb[0].mxu0
    %166 = vdwg.mxu0
    %v167 = vpack.c.bf16 %v161, %v161
    %v168 = vpack.c.bf16 %v163, %v163
    %v171 = vcombine.low %v167, %v168
    %v173 = vunpack.c.l.s4 1983009808
    %v174 = vunpack.c.0.s8 %v173
    %v175 = vlaneseq
    %v176 = vshrl.u32 %v175, 7
    %v177 = vsub.s32 %v174, %v176
    %v178 = vrot.slane %v171, %v177
    %s180 = scalar_lea.vmem [#allocation5], 4
    %181 = vst [vmem:[%s180] sm:$0xf] %v178
    %v182 = vsel %vm39, %v161, 0.0
    %v183 = vsel %vm39, %v163, 0.0
    %v184 = vadd.f32 %v182, %v183
    %185 = vadd.xlane.f32.xlu0 %v184
    %v186 = vpop.xlane.xlu0 %185
    %v187 = vadd.f32 %v106, %v186
    %v188 = vmul.f32 %v161, %v161
    %v189 = vmul.f32 %v163, %v163
    %v190 = vsel %vm39, %v188, 0.0
    %v191 = vsel %vm39, %v189, 0.0
    %v192 = vadd.f32 %v190, %v191
    %193 = vadd.xlane.f32.xlu0 %v192
    %v194 = vpop.xlane.xlu0 %193
    %v195 = vadd.f32 %v114, %v194
    %vm196 = vcmask 3072
    %197 = vst.msk [vmem:[%s3] sm:$0xf] %vm196, %v187
    %198 = vst.msk [vmem:[%s4] sm:$0xf] %vm196, %v195
    // Predicated region
    $region14: #{tpu_custom_call.1} parent=1 // pred_check
      _
    $region15: #{tpu_custom_call.1} parent=1 // pred_check_branch
      %200 = sbr.rel (0) target = $region17
    $region16: #{tpu_custom_call.1} parent=1 // pred_region
      %s202 = ssub.s32 128, 128
      %203 = vsyncadd [#allocation4], %s202
      %s204 = sshll.u32 [#allocation5], 4
      %s205 = int_to_ptr.vmem [resolvable:$true] %s204
      %210 = dma.vmem_to_hbm [thread:$0]  %s205, 128, %s2, [#allocation4], 64, 64, 4
    $region17: #{tpu_custom_call.1} parent=1 // pred_fallthru
      _
    // Predicated region
    $region18: #{tpu_custom_call.1} parent=1 // pred_check
      _
    $region19: #{tpu_custom_call.1} parent=1 // pred_check_branch
      %212 = sbr.rel (0) target = $region21
    $region20: #{tpu_custom_call.1} parent=1 // pred_region
      _
    $region21: #{tpu_custom_call.1} parent=1 // pred_fallthru
      _
    // Predicated region
    $region22: #{tpu_custom_call.1} parent=1 // pred_check
      _
    $region23: #{tpu_custom_call.1} parent=1 // pred_check_branch
      %214 = sbr.rel (0) target = $region25
    $region24: #{tpu_custom_call.1} parent=1 // pred_region
      _
    $region25: #{tpu_custom_call.1} parent=1 // pred_fallthru
      _
    // Predicated region
    $region26: #{tpu_custom_call.1} parent=1 // pred_check
      _
    $region27: #{tpu_custom_call.1} parent=1 // pred_check_branch
      %216 = sbr.rel (0) target = $region29
    $region28: #{tpu_custom_call.1} parent=1 // pred_region
      %217 = dma.done [#allocation4], 128
    $region29: #{tpu_custom_call.1} parent=1 // pred_fallthru
      _
    // Predicated region
    $region30: #{tpu_custom_call.1} parent=1 // pred_check
      _
    $region31: #{tpu_custom_call.1} parent=1 // pred_check_branch
      %219 = sbr.rel (0) target = $region33
    $region32: #{tpu_custom_call.1} parent=1 // pred_region
      _
    $region33: #{tpu_custom_call.1} parent=1 // pred_fallthru
      _
    // Predicated region
    $region34: #{tpu_custom_call.1} parent=1 // pred_check
      _
    $region35: #{tpu_custom_call.1} parent=1 // pred_check_branch
      %221 = sbr.rel (0) target = $region37
    $region36: #{tpu_custom_call.1} parent=1 // pred_region
      _
    $region37: #{tpu_custom_call.1} parent=1 // pred_fallthru
      _
    %222 = vsyncpa [#allocation3], 1
    %223 = vsyncpa [#allocation4], 1

</llo_original>
